<compile_context>
chip_gen: v5e
topology: v5e:2x2
jax: 0.10.0
libtpu: 0.0.40
codegen_flags: <defaults>
</compile_context>

<pallas_src>
import jax
import jax.numpy as jnp
from jax import lax
from jax.experimental import pallas as pl
from jax.experimental.pallas import tpu as pltpu


def _round_up(x, m):
    return ((x + m - 1) // m) * m


def _default_vmem_limit_bytes():
    """~75% of physical VMEM: 96 MiB on v5e/v6e (128 MiB), 48 MiB on v7x (64 MiB)."""
    try:
        cap = int(pltpu.get_tpu_info().vmem_capacity_bytes)
    except Exception:                       # detection unavailable -> v7x-safe value
        cap = 64 * 1024 * 1024
    return max(32 * 1024 * 1024, min(96 * 1024 * 1024, cap * 3 // 4))


# -----------------------------------------------------------------------------
# Shared per-tile forward math.
# -----------------------------------------------------------------------------
def _tile_forward(xu32, w_lo, w_hi, w_cls):
    """Score rows for one block of gathered nodes.

    xu32  : (R, F2) uint32, word f = bf16(feat col 2f) | bf16(feat col 2f+1) << 16
    w_lo  : (F2, D) bf16 = W_enc.T rows 0::2 (even feature columns)
    w_hi  : (F2, D) bf16 = W_enc.T rows 1::2 (odd  feature columns)
    w_cls : (D, Cp) bf16 = weight.T, zero-padded to a lane-dense class count
    returns (R, Cp) f32 == scores.t() rows
    """
    # Unpack the bf16 pairs with shifts only (no lane shuffles): a bf16 bit
    # pattern b is exactly the f32 whose bits are b << 16, so both halves come
    # out as exact f32 values.
    lo = pltpu.bitcast(xu32 << 16, jnp.float32)            # even feature columns
    hi = pltpu.bitcast((xu32 >> 16) << 16, jnp.float32)    # odd  feature columns

    # hidden[n, d] = relu(sum_f x[n, f] * W_enc[d, f]) == enc(nodes).T
    # Same contraction, split over even/odd feature columns (no interleave).
    h = jnp.dot(lo.astype(jnp.bfloat16), w_lo, preferred_element_type=jnp.float32)
    h = h + jnp.dot(hi.astype(jnp.bfloat16), w_hi, preferred_element_type=jnp.float32)
    h = jnp.maximum(h, 0.0)

    # scores.t()[n, c] = sum_d hidden[n, d] * weight[c, d]; bf16 MXU, f32 acc.
    return jnp.dot(h.astype(jnp.bfloat16), w_cls, preferred_element_type=jnp.float32)


# -----------------------------------------------------------------------------
# Path A: feature table in HBM, chunked + pipelined DMA gather (v7x / big tables).
# -----------------------------------------------------------------------------
def _make_hbm_gather_kernel(tile_n, chunk, sem_pool):
    n_chunks = tile_n // chunk

    def kernel(nodes_ref, feats_hbm, wlo_ref, whi_ref, wcls_ref, out_ref,
               xbuf, sem):
        # nodes_ref : (N_pad,)       int32 SMEM (scalar-prefetched node ids)
        # feats_hbm : (T, F2)        uint32 packed-bf16 feature table, HBM (pl.ANY)
        # wlo/whi   : (F2, D)        bf16, grid-invariant VMEM residents
        # wcls_ref  : (D, Cp)        bf16, grid-invariant VMEM resident
        # out_ref   : (TILE_N, Cp)   f32 output tile (scores.t() rows)
        # xbuf      : (2, CHUNK, F2) uint32 double-buffered gather scratch
        # sem       : (2, SEM_POOL)  rotating DMA semaphore pool
        i = pl.program_id(0)
        base = i * tile_n

        def gather(c, slot, wait):
            # Issue (wait=False) or wait on (wait=True) the row DMAs of chunk
            # `c`.  The wait rebuilds byte-identical descriptors (same src row,
            # same dst, same semaphore) so starts and waits always match.
            # Padded tail rows carry node id 0 (a valid row); their results are
            # sliced off in the wrapper.
            @pl.loop(0, chunk)
            def _(r):
                idx = nodes_ref[base + c * chunk + r]
                cp = pltpu.make_async_copy(
                    feats_hbm.at[pl.ds(idx, 1), :],
                    xbuf.at[slot, pl.ds(r, 1), :],
                    sem.at[slot, r % sem_pool],
                )
                if wait:
                    cp.wait()
                else:
                    cp.start()

        gather(0, 0, wait=False)                       # prime the first chunk
        w_lo, w_hi, w_cls = wlo_ref[...], whi_ref[...], wcls_ref[...]

        # Static, short chunk loop (unrolled -> full scheduler visibility).
        # The pipeline is intentionally contained within one grid step so the
        # node axis can stay "parallel" (v7x megacore) without a cross-iteration
        # scratch/semaphore dependency.
        for c in range(n_chunks):
            slot = c & 1
            if c + 1 < n_chunks:                       # overlap next gather ...
                gather(c + 1, 1 - slot, wait=False)
            gather(c, slot, wait=True)                 # ... with this chunk's MXU work
            out_c = _tile_forward(xbuf[slot], w_lo, w_hi, w_cls)
            out_ref[pl.ds(c * chunk, chunk), :] = out_c.astype(out_ref.dtype)

    return kernel


# -----------------------------------------------------------------------------
# Path B: whole packed table VMEM-resident, gather via in-VMEM slices (v5e/v6e).
# -----------------------------------------------------------------------------
def _make_resident_table_kernel(tile_n):
    def kernel(nodes_ref, feats_ref, wlo_ref, whi_ref, wcls_ref, out_ref, xbuf):
        # feats_ref : (T, F2) uint32, whole table resident in VMEM (fetched once)
        # xbuf      : (TILE_N, F2) uint32 gather scratch
        i = pl.program_id(0)
        base = i * tile_n
        # Static row loop: dynamic-index load from the resident table,
        # static-index store into the gather scratch -> zero DMA descriptors.
        for r in range(tile_n):
            idx = nodes_ref[base + r]
            xbuf[pl.ds(r, 1), :] = feats_ref[pl.ds(idx, 1), :]
        out = _tile_forward(xbuf[...], wlo_ref[...], whi_ref[...], wcls_ref[...])
        out_ref[...] = out.astype(out_ref.dtype)

    return kernel


# -----------------------------------------------------------------------------
# Wrapper.
# -----------------------------------------------------------------------------
def supervised_graphsage_forward(features, nodes, w_enc, w_cls, *,
                                 tile_n=None, gather_chunk=32,
                                 resident_table=None, vmem_limit_bytes=None):
    """SupervisedGraphSage.forward: returns scores.t() == (N, num_classes) f32.

    features : (T, F) feature table (the encoder's input features)
    nodes    : (N,)   int node ids
    w_enc    : (D, F) encoder weight  (embeds = relu(w_enc @ feats[nodes].T))
    w_cls    : (C, D) classifier weight (self.weight)
    """
    N = int(nodes.shape[0])
    T, F = features.shape
    D = w_enc.shape[0]
    C = w_cls.shape[0]

    if vmem_limit_bytes is None:
        vmem_limit_bytes = _default_vmem_limit_bytes()

    # --- tile_n: fill the MXU but keep >= 2 grid steps for v7x megacore ------
    if tile_n is None:
        tile_n = min(128, _round_up(max(8, -(-N // 2)), 8))
    assert tile_n % 8 == 0, "tile_n must be a multiple of 8"
    n_pad = _round_up(N, tile_n)
    grid_n = n_pad // tile_n

    # --- gather chunk: rows per DMA batch / per MXU call ----------------------
    gather_chunk = max(8, min(gather_chunk, tile_n))
    while tile_n % gather_chunk:
        gather_chunk -= 8                      # tile_n is a multiple of 8 -> terminates
    sem_pool = min(8, gather_chunk)

    # --- padded dims -----------------------------------------------------------
    f_pad = _round_up(F, 2)                    # bf16 feature pairs pack into one u32
    f2 = f_pad // 2
    c_pad = _round_up(max(C, 128), 128)        # lane-dense (un-masked) output stores

    # --- operand prep ----------------------------------------------------------
    nodes_p = jnp.pad(nodes.astype(jnp.int32), (0, n_pad - N))

    feats_bf16 = jnp.pad(features.astype(jnp.float32),
                         ((0, 0), (0, f_pad - F))).astype(jnp.bfloat16)
    u16 = lax.bitcast_convert_type(feats_bf16, jnp.uint16).astype(jnp.uint32)
    feats_u32 = u16[:, 0::2] | (u16[:, 1::2] << 16)            # (T, F2) packed rows

    w_enc_t = jnp.pad(w_enc.astype(jnp.float32), ((0, 0), (0, f_pad - F))).T
    w_lo = w_enc_t[0::2, :].astype(jnp.bfloat16)               # (F2, D) even cols
    w_hi = w_enc_t[1::2, :].astype(jnp.bfloat16)               # (F2, D) odd  cols
    w_cls_t = jnp.zeros((D, c_pad), jnp.bfloat16).at[:, :C].set(
        w_cls.T.astype(jnp.bfloat16))                          # (D, Cp)

    # --- resident-vs-HBM feature table ----------------------------------------
    table_bytes = T * f2 * 4
    if resident_table is None:
        # Keep the table VMEM-resident only if it leaves room for the weights,
        # gather scratch and the double-buffered output tile (v7x: 64 MiB VMEM).
        resident_table = table_bytes <= vmem_limit_bytes // 3

    weight_specs = [
        pl.BlockSpec((f2, D), lambda i, ids: (0, 0)),
        pl.BlockSpec((f2, D), lambda i, ids: (0, 0)),
        pl.BlockSpec((D, c_pad), lambda i, ids: (0, 0)),
    ]

    if resident_table:
        kernel = _make_resident_table_kernel(tile_n)
        feat_spec = pl.BlockSpec((T, f2), lambda i, ids: (0, 0))    # whole table, once
        scratch = [pltpu.VMEM((tile_n, f2), jnp.uint32)]
        gather_bytes = table_bytes
    else:
        kernel = _make_hbm_gather_kernel(tile_n, gather_chunk, sem_pool)
        feat_spec = pl.BlockSpec(memory_space=pl.ANY)               # stays in HBM
        scratch = [pltpu.VMEM((2, gather_chunk, f2), jnp.uint32),
                   pltpu.SemaphoreType.DMA((2, sem_pool))]
        gather_bytes = n_pad * f2 * 4

    cost = pl.CostEstimate(
        flops=2 * n_pad * f_pad * D + 2 * n_pad * D * c_pad,
        transcendentals=0,
        bytes_accessed=int(gather_bytes + 2 * (2 * f2 * D + D * c_pad)
                           + n_pad * c_pad * 4 + n_pad * 4),
    )

    out = pl.pallas_call(
        kernel,
        out_shape=jax.ShapeDtypeStruct((n_pad, c_pad), jnp.float32),
        grid_spec=pltpu.PrefetchScalarGridSpec(
            num_scalar_prefetch=1,
            grid=(grid_n,),
            in_specs=[feat_spec] + weight_specs,
            out_specs=pl.BlockSpec((tile_n, c_pad), lambda i, ids: (i, 0)),
            scratch_shapes=scratch,
        ),
        compiler_params=pltpu.CompilerParams(
            dimension_semantics=("parallel",),        # v7x: shard tiles across both TCs
            vmem_limit_bytes=int(vmem_limit_bytes),
        ),
        cost_estimate=cost,
    )(nodes_p, feats_u32, w_lo, w_hi, w_cls_t)

    return out[:N, :C]


def xavier_uniform(key, shape):
    fan_out, fan_in = shape
    a = (6.0 / (fan_in + fan_out)) ** 0.5
    return jax.random.uniform(key, shape, jnp.float32, minval=-a, maxval=a)


if __name__ == "__main__":
    # Small deterministic setup.
    num_total_nodes = 64   # feature-table rows
    feat_dim = 16          # raw feature dim
    embed_dim = 32         # enc.embed_dim
    num_classes = 8
    batch_nodes = 40       # NOT a multiple of tile_n -> exercises tail padding
    tile_n = 16            # small demo tile (real runs: tile_n=None -> 128)
    gather_chunk = 8       # 2 chunks / tile -> exercises the in-step DMA pipeline

    key = jax.random.PRNGKey(0)
    k_feat, k_enc, k_cls, k_idx = jax.random.split(key, 4)

    # bf16-representable f32 inputs so the in-kernel bf16 MXU path is exact.
    features = jax.random.normal(k_feat, (num_total_nodes, feat_dim), jnp.float32)
    features = features.astype(jnp.bfloat16).astype(jnp.float32)
    nodes = jax.random.randint(k_idx, (batch_nodes,), 0, num_total_nodes)

    w_enc = xavier_uniform(k_enc, (embed_dim, feat_dim))
    w_enc = w_enc.astype(jnp.bfloat16).astype(jnp.float32)        # encoder weight
    w_cls = xavier_uniform(k_cls, (num_classes, embed_dim))
    w_cls = w_cls.astype(jnp.bfloat16).astype(jnp.float32)        # self.weight

    # Pure-JAX reference of the PyTorch forward: (weight @ relu(W_enc @ x.T)).T
    x = features[nodes]                                   # (N, F)
    embeds = jnp.maximum(w_enc @ x.T, 0.0)                # (D, N)
    ref_f32 = (w_cls @ embeds).T                          # (N, C) == scores.t()
    # bf16-MXU-aware reference (hidden rounded to bf16 before the classifier mm,
    # exactly what the kernel's second bf16 matmul does).
    embeds_b = embeds.astype(jnp.bfloat16).astype(jnp.float32)
    ref_b16 = (w_cls @ embeds_b).T

    # Exercise both paths: VMEM-resident table (v5e/v6e small-table choice) and
    # HBM table + chunked, pipelined DMA gather (v7x / large-table choice).
    for resident in (True, False):
        scores_t = supervised_graphsage_forward(
            features, nodes, w_enc, w_cls,
            tile_n=tile_n, gather_chunk=gather_chunk, resident_table=resident)
        scores_t = jax.block_until_ready(scores_t)
        assert scores_t.shape == (batch_nodes, num_classes)
        assert jnp.allclose(scores_t, ref_b16, atol=2e-3, rtol=2e-3), (
            f"mismatch vs bf16-aware reference (resident_table={resident})")
        assert jnp.allclose(scores_t, ref_f32, atol=2e-2, rtol=2e-2), (
            f"mismatch vs f32 reference (resident_table={resident})")

    print("KERNEL_OK")
</pallas_src>

<mosaic_0001>
module attributes {stable_mosaic.version = 11 : i64} {
  func.func @kernel(%arg0: i32, %arg1: memref<48xi32, #tpu.memory_space<smem>>, %arg2: memref<64x8xi32, #tpu.memory_space<vmem>>, %arg3: memref<8x32xbf16, #tpu.memory_space<vmem>>, %arg4: memref<8x32xbf16, #tpu.memory_space<vmem>>, %arg5: memref<32x128xbf16, #tpu.memory_space<vmem>>, %arg6: memref<16x128xf32, #tpu.memory_space<vmem>>, %arg7: memref<16x8xi32, #tpu.memory_space<vmem>>) attributes {dimension_semantics = [#tpu.dimension_semantics<parallel>], iteration_bounds = array<i64: 3>, scalar_prefetch = 1 : i64, scratch_operands = 1 : i64, tpu.core_type = #tpu.core_type<tc>, window_params = [{pipeline_mode = #tpu.pipeline_mode<synchronous>, transform_indices = @transform_0, window_bounds = array<i64: 64, 8>}, {pipeline_mode = #tpu.pipeline_mode<synchronous>, transform_indices = @transform_1, window_bounds = array<i64: 8, 32>}, {pipeline_mode = #tpu.pipeline_mode<synchronous>, transform_indices = @transform_2, window_bounds = array<i64: 8, 32>}, {pipeline_mode = #tpu.pipeline_mode<synchronous>, transform_indices = @transform_3, window_bounds = array<i64: 32, 128>}, {transform_indices = @transform_4, window_bounds = array<i64: 16, 128>}]} {
    %c16_i32 = arith.constant 16 : i32
    %0 = arith.muli %arg0, %c16_i32 : i32
    %c0_i32 = arith.constant 0 : i32
    %1 = arith.addi %0, %c0_i32 : i32
    %2 = arith.index_cast %1 : i32 to index
    %3 = memref.load %arg1[%2] : memref<48xi32, #tpu.memory_space<smem>>
    %4 = arith.index_cast %3 : i32 to index
    %c0 = arith.constant 0 : index
    %5 = vector.load %arg2[%4, %c0] : memref<64x8xi32, #tpu.memory_space<vmem>>, vector<1x8xi32>
    %c0_0 = arith.constant 0 : index
    %c0_1 = arith.constant 0 : index
    %6 = vector.load %arg7[%c0_0, %c0_1] : memref<16x8xi32, #tpu.memory_space<vmem>>, vector<1x8xi32>
    tpu.vector_store %arg7[%c0_0, %c0_1], %5 {strides = array<i32>} : memref<16x8xi32, #tpu.memory_space<vmem>>, vector<1x8xi32>,
    %c1_i32 = arith.constant 1 : i32
    %7 = arith.addi %0, %c1_i32 : i32
    %8 = arith.index_cast %7 : i32 to index
    %9 = memref.load %arg1[%8] : memref<48xi32, #tpu.memory_space<smem>>
    %10 = arith.index_cast %9 : i32 to index
    %c0_2 = arith.constant 0 : index
    %11 = vector.load %arg2[%10, %c0_2] : memref<64x8xi32, #tpu.memory_space<vmem>>, vector<1x8xi32>
    %c1 = arith.constant 1 : index
    %c0_3 = arith.constant 0 : index
    %12 = vector.load %arg7[%c1, %c0_3] : memref<16x8xi32, #tpu.memory_space<vmem>>, vector<1x8xi32>
    tpu.vector_store %arg7[%c1, %c0_3], %11 {strides = array<i32>} : memref<16x8xi32, #tpu.memory_space<vmem>>, vector<1x8xi32>,
    %c2_i32 = arith.constant 2 : i32
    %13 = arith.addi %0, %c2_i32 : i32
    %14 = arith.index_cast %13 : i32 to index
    %15 = memref.load %arg1[%14] : memref<48xi32, #tpu.memory_space<smem>>
    %16 = arith.index_cast %15 : i32 to index
    %c0_4 = arith.constant 0 : index
    %17 = vector.load %arg2[%16, %c0_4] : memref<64x8xi32, #tpu.memory_space<vmem>>, vector<1x8xi32>
    %c2 = arith.constant 2 : index
    %c0_5 = arith.constant 0 : index
    %18 = vector.load %arg7[%c2, %c0_5] : memref<16x8xi32, #tpu.memory_space<vmem>>, vector<1x8xi32>
    tpu.vector_store %arg7[%c2, %c0_5], %17 {strides = array<i32>} : memref<16x8xi32, #tpu.memory_space<vmem>>, vector<1x8xi32>,
    %c3_i32 = arith.constant 3 : i32
    %19 = arith.addi %0, %c3_i32 : i32
    %20 = arith.index_cast %19 : i32 to index
    %21 = memref.load %arg1[%20] : memref<48xi32, #tpu.memory_space<smem>>
    %22 = arith.index_cast %21 : i32 to index
    %c0_6 = arith.constant 0 : index
    %23 = vector.load %arg2[%22, %c0_6] : memref<64x8xi32, #tpu.memory_space<vmem>>, vector<1x8xi32>
    %c3 = arith.constant 3 : index
    %c0_7 = arith.constant 0 : index
    %24 = vector.load %arg7[%c3, %c0_7] : memref<16x8xi32, #tpu.memory_space<vmem>>, vector<1x8xi32>
    tpu.vector_store %arg7[%c3, %c0_7], %23 {strides = array<i32>} : memref<16x8xi32, #tpu.memory_space<vmem>>, vector<1x8xi32>,
    %c4_i32 = arith.constant 4 : i32
    %25 = arith.addi %0, %c4_i32 : i32
    %26 = arith.index_cast %25 : i32 to index
    %27 = memref.load %arg1[%26] : memref<48xi32, #tpu.memory_space<smem>>
    %28 = arith.index_cast %27 : i32 to index
    %c0_8 = arith.constant 0 : index
    %29 = vector.load %arg2[%28, %c0_8] : memref<64x8xi32, #tpu.memory_space<vmem>>, vector<1x8xi32>
    %c4 = arith.constant 4 : index
    %c0_9 = arith.constant 0 : index
    %30 = vector.load %arg7[%c4, %c0_9] : memref<16x8xi32, #tpu.memory_space<vmem>>, vector<1x8xi32>
    tpu.vector_store %arg7[%c4, %c0_9], %29 {strides = array<i32>} : memref<16x8xi32, #tpu.memory_space<vmem>>, vector<1x8xi32>,
    %c5_i32 = arith.constant 5 : i32
    %31 = arith.addi %0, %c5_i32 : i32
    %32 = arith.index_cast %31 : i32 to index
    %33 = memref.load %arg1[%32] : memref<48xi32, #tpu.memory_space<smem>>
    %34 = arith.index_cast %33 : i32 to index
    %c0_10 = arith.constant 0 : index
    %35 = vector.load %arg2[%34, %c0_10] : memref<64x8xi32, #tpu.memory_space<vmem>>, vector<1x8xi32>
    %c5 = arith.constant 5 : index
    %c0_11 = arith.constant 0 : index
    %36 = vector.load %arg7[%c5, %c0_11] : memref<16x8xi32, #tpu.memory_space<vmem>>, vector<1x8xi32>
    tpu.vector_store %arg7[%c5, %c0_11], %35 {strides = array<i32>} : memref<16x8xi32, #tpu.memory_space<vmem>>, vector<1x8xi32>,
    %c6_i32 = arith.constant 6 : i32
    %37 = arith.addi %0, %c6_i32 : i32
    %38 = arith.index_cast %37 : i32 to index
    %39 = memref.load %arg1[%38] : memref<48xi32, #tpu.memory_space<smem>>
    %40 = arith.index_cast %39 : i32 to index
    %c0_12 = arith.constant 0 : index
    %41 = vector.load %arg2[%40, %c0_12] : memref<64x8xi32, #tpu.memory_space<vmem>>, vector<1x8xi32>
    %c6 = arith.constant 6 : index
    %c0_13 = arith.constant 0 : index
    %42 = vector.load %arg7[%c6, %c0_13] : memref<16x8xi32, #tpu.memory_space<vmem>>, vector<1x8xi32>
    tpu.vector_store %arg7[%c6, %c0_13], %41 {strides = array<i32>} : memref<16x8xi32, #tpu.memory_space<vmem>>, vector<1x8xi32>,
    %c7_i32 = arith.constant 7 : i32
    %43 = arith.addi %0, %c7_i32 : i32
    %44 = arith.index_cast %43 : i32 to index
    %45 = memref.load %arg1[%44] : memref<48xi32, #tpu.memory_space<smem>>
    %46 = arith.index_cast %45 : i32 to index
    %c0_14 = arith.constant 0 : index
    %47 = vector.load %arg2[%46, %c0_14] : memref<64x8xi32, #tpu.memory_space<vmem>>, vector<1x8xi32>
    %c7 = arith.constant 7 : index
    %c0_15 = arith.constant 0 : index
    %48 = vector.load %arg7[%c7, %c0_15] : memref<16x8xi32, #tpu.memory_space<vmem>>, vector<1x8xi32>
    tpu.vector_store %arg7[%c7, %c0_15], %47 {strides = array<i32>} : memref<16x8xi32, #tpu.memory_space<vmem>>, vector<1x8xi32>,
    %c8_i32 = arith.constant 8 : i32
    %49 = arith.addi %0, %c8_i32 : i32
    %50 = arith.index_cast %49 : i32 to index
    %51 = memref.load %arg1[%50] : memref<48xi32, #tpu.memory_space<smem>>
    %52 = arith.index_cast %51 : i32 to index
    %c0_16 = arith.constant 0 : index
    %53 = vector.load %arg2[%52, %c0_16] : memref<64x8xi32, #tpu.memory_space<vmem>>, vector<1x8xi32>
    %c8 = arith.constant 8 : index
    %c0_17 = arith.constant 0 : index
    %54 = vector.load %arg7[%c8, %c0_17] : memref<16x8xi32, #tpu.memory_space<vmem>>, vector<1x8xi32>
    tpu.vector_store %arg7[%c8, %c0_17], %53 {strides = array<i32>} : memref<16x8xi32, #tpu.memory_space<vmem>>, vector<1x8xi32>,
    %c9_i32 = arith.constant 9 : i32
    %55 = arith.addi %0, %c9_i32 : i32
    %56 = arith.index_cast %55 : i32 to index
    %57 = memref.load %arg1[%56] : memref<48xi32, #tpu.memory_space<smem>>
    %58 = arith.index_cast %57 : i32 to index
    %c0_18 = arith.constant 0 : index
    %59 = vector.load %arg2[%58, %c0_18] : memref<64x8xi32, #tpu.memory_space<vmem>>, vector<1x8xi32>
    %c9 = arith.constant 9 : index
    %c0_19 = arith.constant 0 : index
    %60 = vector.load %arg7[%c9, %c0_19] : memref<16x8xi32, #tpu.memory_space<vmem>>, vector<1x8xi32>
    tpu.vector_store %arg7[%c9, %c0_19], %59 {strides = array<i32>} : memref<16x8xi32, #tpu.memory_space<vmem>>, vector<1x8xi32>,
    %c10_i32 = arith.constant 10 : i32
    %61 = arith.addi %0, %c10_i32 : i32
    %62 = arith.index_cast %61 : i32 to index
    %63 = memref.load %arg1[%62] : memref<48xi32, #tpu.memory_space<smem>>
    %64 = arith.index_cast %63 : i32 to index
    %c0_20 = arith.constant 0 : index
    %65 = vector.load %arg2[%64, %c0_20] : memref<64x8xi32, #tpu.memory_space<vmem>>, vector<1x8xi32>
    %c10 = arith.constant 10 : index
    %c0_21 = arith.constant 0 : index
    %66 = vector.load %arg7[%c10, %c0_21] : memref<16x8xi32, #tpu.memory_space<vmem>>, vector<1x8xi32>
    tpu.vector_store %arg7[%c10, %c0_21], %65 {strides = array<i32>} : memref<16x8xi32, #tpu.memory_space<vmem>>, vector<1x8xi32>,
    %c11_i32 = arith.constant 11 : i32
    %67 = arith.addi %0, %c11_i32 : i32
    %68 = arith.index_cast %67 : i32 to index
    %69 = memref.load %arg1[%68] : memref<48xi32, #tpu.memory_space<smem>>
    %70 = arith.index_cast %69 : i32 to index
    %c0_22 = arith.constant 0 : index
    %71 = vector.load %arg2[%70, %c0_22] : memref<64x8xi32, #tpu.memory_space<vmem>>, vector<1x8xi32>
    %c11 = arith.constant 11 : index
    %c0_23 = arith.constant 0 : index
    %72 = vector.load %arg7[%c11, %c0_23] : memref<16x8xi32, #tpu.memory_space<vmem>>, vector<1x8xi32>
    tpu.vector_store %arg7[%c11, %c0_23], %71 {strides = array<i32>} : memref<16x8xi32, #tpu.memory_space<vmem>>, vector<1x8xi32>,
    %c12_i32 = arith.constant 12 : i32
    %73 = arith.addi %0, %c12_i32 : i32
    %74 = arith.index_cast %73 : i32 to index
    %75 = memref.load %arg1[%74] : memref<48xi32, #tpu.memory_space<smem>>
    %76 = arith.index_cast %75 : i32 to index
    %c0_24 = arith.constant 0 : index
    %77 = vector.load %arg2[%76, %c0_24] : memref<64x8xi32, #tpu.memory_space<vmem>>, vector<1x8xi32>
    %c12 = arith.constant 12 : index
    %c0_25 = arith.constant 0 : index
    %78 = vector.load %arg7[%c12, %c0_25] : memref<16x8xi32, #tpu.memory_space<vmem>>, vector<1x8xi32>
    tpu.vector_store %arg7[%c12, %c0_25], %77 {strides = array<i32>} : memref<16x8xi32, #tpu.memory_space<vmem>>, vector<1x8xi32>,
    %c13_i32 = arith.constant 13 : i32
    %79 = arith.addi %0, %c13_i32 : i32
    %80 = arith.index_cast %79 : i32 to index
    %81 = memref.load %arg1[%80] : memref<48xi32, #tpu.memory_space<smem>>
    %82 = arith.index_cast %81 : i32 to index
    %c0_26 = arith.constant 0 : index
    %83 = vector.load %arg2[%82, %c0_26] : memref<64x8xi32, #tpu.memory_space<vmem>>, vector<1x8xi32>
    %c13 = arith.constant 13 : index
    %c0_27 = arith.constant 0 : index
    %84 = vector.load %arg7[%c13, %c0_27] : memref<16x8xi32, #tpu.memory_space<vmem>>, vector<1x8xi32>
    tpu.vector_store %arg7[%c13, %c0_27], %83 {strides = array<i32>} : memref<16x8xi32, #tpu.memory_space<vmem>>, vector<1x8xi32>,
    %c14_i32 = arith.constant 14 : i32
    %85 = arith.addi %0, %c14_i32 : i32
    %86 = arith.index_cast %85 : i32 to index
    %87 = memref.load %arg1[%86] : memref<48xi32, #tpu.memory_space<smem>>
    %88 = arith.index_cast %87 : i32 to index
    %c0_28 = arith.constant 0 : index
    %89 = vector.load %arg2[%88, %c0_28] : memref<64x8xi32, #tpu.memory_space<vmem>>, vector<1x8xi32>
    %c14 = arith.constant 14 : index
    %c0_29 = arith.constant 0 : index
    %90 = vector.load %arg7[%c14, %c0_29] : memref<16x8xi32, #tpu.memory_space<vmem>>, vector<1x8xi32>
    tpu.vector_store %arg7[%c14, %c0_29], %89 {strides = array<i32>} : memref<16x8xi32, #tpu.memory_space<vmem>>, vector<1x8xi32>,
    %c15_i32 = arith.constant 15 : i32
    %91 = arith.addi %0, %c15_i32 : i32
    %92 = arith.index_cast %91 : i32 to index
    %93 = memref.load %arg1[%92] : memref<48xi32, #tpu.memory_space<smem>>
    %94 = arith.index_cast %93 : i32 to index
    %c0_30 = arith.constant 0 : index
    %95 = vector.load %arg2[%94, %c0_30] : memref<64x8xi32, #tpu.memory_space<vmem>>, vector<1x8xi32>
    %c15 = arith.constant 15 : index
    %c0_31 = arith.constant 0 : index
    %96 = vector.load %arg7[%c15, %c0_31] : memref<16x8xi32, #tpu.memory_space<vmem>>, vector<1x8xi32>
    tpu.vector_store %arg7[%c15, %c0_31], %95 {strides = array<i32>} : memref<16x8xi32, #tpu.memory_space<vmem>>, vector<1x8xi32>,
    %c0_32 = arith.constant 0 : index
    %c0_33 = arith.constant 0 : index
    %97 = vector.load %arg7[%c0_32, %c0_33] : memref<16x8xi32, #tpu.memory_space<vmem>>, vector<16x8xi32>
    %c0_34 = arith.constant 0 : index
    %c0_35 = arith.constant 0 : index
    %98 = vector.load %arg3[%c0_34, %c0_35] : memref<8x32xbf16, #tpu.memory_space<vmem>>, vector<8x32xbf16>
    %c0_36 = arith.constant 0 : index
    %c0_37 = arith.constant 0 : index
    %99 = vector.load %arg4[%c0_36, %c0_37] : memref<8x32xbf16, #tpu.memory_space<vmem>>, vector<8x32xbf16>
    %c0_38 = arith.constant 0 : index
    %c0_39 = arith.constant 0 : index
    %100 = vector.load %arg5[%c0_38, %c0_39] : memref<32x128xbf16, #tpu.memory_space<vmem>>, vector<32x128xbf16>
    %c16_i32_40 = arith.constant 16 : i32
    %101 = vector.broadcast %c16_i32_40 : i32 to vector<16x8xi32>
    %102 = arith.shli %97, %101 : vector<16x8xi32>
    %103 = tpu.bitcast %102 : vector<16x8xi32> -> vector<16x8xf32>
    %c16_i32_41 = arith.constant 16 : i32
    %104 = vector.broadcast %c16_i32_41 : i32 to vector<16x8xi32>
    %105 = arith.shrui %97, %104 : vector<16x8xi32>
    %c16_i32_42 = arith.constant 16 : i32
    %106 = vector.broadcast %c16_i32_42 : i32 to vector<16x8xi32>
    %107 = arith.shli %105, %106 : vector<16x8xi32>
    %108 = tpu.bitcast %107 : vector<16x8xi32> -> vector<16x8xf32>
    %109 = arith.truncf %103 : vector<16x8xf32> to vector<16x8xbf16>
    %cst = arith.constant dense<0.000000e+00> : vector<16x32xf32>
    %110 = tpu.matmul %109, %98, %cst {dimension_numbers = #tpu.dot_dimension_numbers<[1], [0], [0], [1], [0, 0, 1, 1], [], []>} : vector<16x8xbf16>, vector<8x32xbf16>, vector<16x32xf32> -> vector<16x32xf32>
    %111 = arith.truncf %108 : vector<16x8xf32> to vector<16x8xbf16>
    %cst_43 = arith.constant dense<0.000000e+00> : vector<16x32xf32>
    %112 = tpu.matmul %111, %99, %cst_43 {dimension_numbers = #tpu.dot_dimension_numbers<[1], [0], [0], [1], [0, 0, 1, 1], [], []>} : vector<16x8xbf16>, vector<8x32xbf16>, vector<16x32xf32> -> vector<16x32xf32>
    %113 = arith.addf %110, %112 : vector<16x32xf32>
    %cst_44 = arith.constant 0.000000e+00 : f32
    %114 = vector.broadcast %cst_44 : f32 to vector<16x32xf32>
    %115 = arith.maximumf %113, %114 : vector<16x32xf32>
    %116 = arith.truncf %115 : vector<16x32xf32> to vector<16x32xbf16>
    %cst_45 = arith.constant dense<0.000000e+00> : vector<16x128xf32>
    %117 = tpu.matmul %116, %100, %cst_45 {dimension_numbers = #tpu.dot_dimension_numbers<[1], [0], [0], [1], [0, 0, 1, 1], [], []>} : vector<16x32xbf16>, vector<32x128xbf16>, vector<16x128xf32> -> vector<16x128xf32>
    %c0_46 = arith.constant 0 : index
    %c0_47 = arith.constant 0 : index
    %118 = vector.load %arg6[%c0_46, %c0_47] : memref<16x128xf32, #tpu.memory_space<vmem>>, vector<16x128xf32>
    tpu.vector_store %arg6[%c0_46, %c0_47], %117 {strides = array<i32>} : memref<16x128xf32, #tpu.memory_space<vmem>>, vector<16x128xf32>,
    return
  }
  func.func @transform_0(%arg0: i32, %arg1: memref<48xi32, #tpu.memory_space<smem>>) -> (i32, i32) {
    %c0_i32 = arith.constant 0 : i32
    %c0_i32_0 = arith.constant 0 : i32
    %c0_i32_1 = arith.constant 0 : i32
    return %c0_i32, %c0_i32_0 : i32, i32
  }
  func.func @transform_1(%arg0: i32, %arg1: memref<48xi32, #tpu.memory_space<smem>>) -> (i32, i32) {
    %c0_i32 = arith.constant 0 : i32
    %c0_i32_0 = arith.constant 0 : i32
    %c0_i32_1 = arith.constant 0 : i32
    return %c0_i32, %c0_i32_0 : i32, i32
  }
  func.func @transform_2(%arg0: i32, %arg1: memref<48xi32, #tpu.memory_space<smem>>) -> (i32, i32) {
    %c0_i32 = arith.constant 0 : i32
    %c0_i32_0 = arith.constant 0 : i32
    %c0_i32_1 = arith.constant 0 : i32
    return %c0_i32, %c0_i32_0 : i32, i32
  }
  func.func @transform_3(%arg0: i32, %arg1: memref<48xi32, #tpu.memory_space<smem>>) -> (i32, i32) {
    %c0_i32 = arith.constant 0 : i32
    %c0_i32_0 = arith.constant 0 : i32
    %c0_i32_1 = arith.constant 0 : i32
    return %c0_i32, %c0_i32_0 : i32, i32
  }
  func.func @transform_4(%arg0: i32, %arg1: memref<48xi32, #tpu.memory_space<smem>>) -> (i32, i32) {
    %c0_i32 = arith.constant 0 : i32
    %c0_i32_0 = arith.constant 0 : i32
    return %arg0, %c0_i32 : i32, i32
  }
}

</mosaic_0001>

<llo_original>
// kernel: tpu_custom_call.1
$region0: #{tpu_custom_call.1}
  #allocation0 [shape = 'u32[]', space=smem, size = 0x4, offset = 0x4, fixed_abs, tag = 'smem constant byte address 0x4 - core index']
  #allocation1 [shape = 'u32[72,128]{1,0:T(1,128)}', space=vmem, size = 0x9000, scoped, tag = 'internal scratch']
  #allocation2 [shape = 's32[16,8]{1,0:T(8,128)}', space=vmem, size = 0x2000, scoped, tag = 'scratch operand']
  #allocation3 [shape = 's32[1]{0}', space=sflag, size = 0x4, scoped, tag = 'scoped memory for tpu_custom_call.1']
  #allocation4 [shape = 'u8[512]{0}', space=smem, size = 0x200, scoped, tag = 'prefetched SMEM operand 0']
  %s0 = inlined_call_operand.vmem [shape: s32[48], index: 0, kind: input, shape index: {}]
  %s1 = inlined_call_operand.vmem [shape: u32[64,8], index: 1, kind: input, shape index: {}]
  %s2 = inlined_call_operand.vmem [shape: bf16[8,32], index: 2, kind: input, shape index: {}]
  %s3 = inlined_call_operand.vmem [shape: bf16[8,32], index: 3, kind: input, shape index: {}]
  %s4 = inlined_call_operand.vmem [shape: bf16[32,128], index: 4, kind: input, shape index: {}]
  %s5 = inlined_call_operand.hbm [shape: f32[48,128], index: 5, kind: output, shape index: {}]
  %s6 = sld [smem:[#allocation0]]
  $region49: #{tpu_custom_call.1} parent=0
    _
  %s8 = ssub.s32 1, %s6
  %s9 = scalar_select 0, %s8, %s6
  %s11 = sshll.u32 %s0, 4
  %s12 = int_to_ptr.vmem [resolvable:$true] %s11
  %14 = dma.vmem_to_smem %s12, 16, [#allocation4], [#allocation3]
  %16 = dma.done [#allocation3], 16
  %17 = sfence
  $region1: #{tpu_custom_call.1} parent=0
    #allocation5 [shape = 'u8[16384]{0}', space=vmem, size = 0x4000, scoped, tag = 'output window, operand 0']
    #allocation6 [shape = 's32[2]{0}', space=sflag, size = 0x8, scoped, tag = 'scoped memory for tpu_custom_call.1']
    %18 = vsyncpa [#allocation6], 0
    %s19 = scalar_lea.sflag [#allocation6], 1
    %20 = vsyncpa %s19, 0
    loop: start=0, step=1, limit=5
    $region2: #{tpu_custom_call.1} parent=1 // loop_pre_header
      _
    $region3: #{tpu_custom_call.1} parent=1 // loop_header
      %s22 = sphi 0, %s26
      %p23 = scmp.ge.s32.totalorder %s22, 5
      %s30 = sphi 0, %s30
      %s32 = sphi 0, %s30
      %s33 = sphi 0, %s32
      %s47 = sphi 0, %s33
      %s51 = sphi 0, %s51
      %s53 = sphi 0, %s51
      %s54 = sphi 0, %s53
      %s68 = sphi 0, %s54
      %s72 = sphi 0, %s72
      %s74 = sphi 0, %s72
      %s75 = sphi 0, %s74
      %s89 = sphi 0, %s75
      %s93 = sphi 0, %s93
      %s95 = sphi 0, %s93
      %s96 = sphi 0, %s95
      %s110 = sphi 0, %s96
      %s116 = sphi 0, %s118
      %s119 = sphi 0, %s116
      %s120 = sphi 0, %s119
      %s136 = sphi 0, %s120
    $region4: #{tpu_custom_call.1} parent=1 // loop_header_branch
      %25 = sbr.rel (%p23) target = $region8
    $region5: #{tpu_custom_call.1} parent=1 // loop_body
      %s27 = ssub.s32 %s22, 1
      %s28 = ssub.s32 %s22, 2
      %s29 = sadd.s32 %s22, 1
      %s31 = sadd.s32 %s30, 1
      %p34 = scmp.eq.s32.totalorder %s22, 2
      %p35 = scmp.ne.s32.totalorder %s30, %s32
      %p36 = scmp.eq.s32.totalorder %s22, 0
      %p37 = por %p35, %p36
      %p38 = scmp.ne.s32.totalorder %s30, %s32
      %p39 = scmp.eq.s32.totalorder %s27, 2
      %p40 = por %p38, %p39
      %p41 = scmp.ne.s32.totalorder %s32, %s33
      %p42 = scmp.eq.s32.totalorder %s27, 0
      %p43 = por %p41, %p42
      %p44 = scmp.ne.s32.totalorder %s32, %s33
      %p45 = scmp.eq.s32.totalorder %s28, 2
      %p46 = por %p44, %p45
      %p48 = scmp.ne.s32.totalorder %s33, %s47
      %p49 = scmp.eq.s32.totalorder %s28, 0
      %p50 = por %p48, %p49
      %s52 = sadd.s32 %s51, 1
      %p55 = scmp.eq.s32.totalorder %s22, 2
      %p56 = scmp.ne.s32.totalorder %s51, %s53
      %p57 = scmp.eq.s32.totalorder %s22, 0
      %p58 = por %p56, %p57
      %p59 = scmp.ne.s32.totalorder %s51, %s53
      %p60 = scmp.eq.s32.totalorder %s27, 2
      %p61 = por %p59, %p60
      %p62 = scmp.ne.s32.totalorder %s53, %s54
      %p63 = scmp.eq.s32.totalorder %s27, 0
      %p64 = por %p62, %p63
      %p65 = scmp.ne.s32.totalorder %s53, %s54
      %p66 = scmp.eq.s32.totalorder %s28, 2
      %p67 = por %p65, %p66
      %p69 = scmp.ne.s32.totalorder %s54, %s68
      %p70 = scmp.eq.s32.totalorder %s28, 0
      %p71 = por %p69, %p70
      %s73 = sadd.s32 %s72, 1
      %p76 = scmp.eq.s32.totalorder %s22, 2
      %p77 = scmp.ne.s32.totalorder %s72, %s74
      %p78 = scmp.eq.s32.totalorder %s22, 0
      %p79 = por %p77, %p78
      %p80 = scmp.ne.s32.totalorder %s72, %s74
      %p81 = scmp.eq.s32.totalorder %s27, 2
      %p82 = por %p80, %p81
      %p83 = scmp.ne.s32.totalorder %s74, %s75
      %p84 = scmp.eq.s32.totalorder %s27, 0
      %p85 = por %p83, %p84
      %p86 = scmp.ne.s32.totalorder %s74, %s75
      %p87 = scmp.eq.s32.totalorder %s28, 2
      %p88 = por %p86, %p87
      %p90 = scmp.ne.s32.totalorder %s75, %s89
      %p91 = scmp.eq.s32.totalorder %s28, 0
      %p92 = por %p90, %p91
      %s94 = sadd.s32 %s93, 1
      %p97 = scmp.eq.s32.totalorder %s22, 2
      %p98 = scmp.ne.s32.totalorder %s93, %s95
      %p99 = scmp.eq.s32.totalorder %s22, 0
      %p100 = por %p98, %p99
      %p101 = scmp.ne.s32.totalorder %s93, %s95
      %p102 = scmp.eq.s32.totalorder %s27, 2
      %p103 = por %p101, %p102
      %p104 = scmp.ne.s32.totalorder %s95, %s96
      %p105 = scmp.eq.s32.totalorder %s27, 0
      %p106 = por %p104, %p105
      %p107 = scmp.ne.s32.totalorder %s95, %s96
      %p108 = scmp.eq.s32.totalorder %s28, 2
      %p109 = por %p107, %p108
      %p111 = scmp.ne.s32.totalorder %s96, %s110
      %p112 = scmp.eq.s32.totalorder %s28, 0
      %p113 = por %p111, %p112
      %s114 = ssub.s32 %s22, %s29
      %p115 = scmp.eq.s32.totalorder %s114, 0
      %s117 = sadd.s32 %s116, 1
      %s118 = scalar_select %p115, %s116, %s117
      %p121 = pneg %p115
      %p122 = scmp.eq.s32.totalorder %s22, 2
      %p123 = por %p121, %p122
      %p124 = scmp.ne.s32.totalorder %s116, %s119
      %p125 = scmp.eq.s32.totalorder %s22, 0
      %p126 = por %p124, %p125
      %p127 = scmp.ne.s32.totalorder %s116, %s119
      %p128 = scmp.eq.s32.totalorder %s27, 2
      %p129 = por %p127, %p128
      %p130 = scmp.ne.s32.totalorder %s119, %s120
      %p131 = scmp.eq.s32.totalorder %s27, 0
      %p132 = por %p130, %p131
      %p133 = scmp.ne.s32.totalorder %s119, %s120
      %p134 = scmp.eq.s32.totalorder %s28, 2
      %p135 = por %p133, %p134
      %p137 = scmp.ne.s32.totalorder %s120, %s136
      %p138 = scmp.eq.s32.totalorder %s28, 0
      %p139 = por %p137, %p138
      %p140 = scmp.le.s32.totalorder 1, %s22
      %p141 = scmp.lt.s32.totalorder %s22, 4
      %p142 = pnand %p140, %p141
      %p143 = pneg %p142
      // Predicated region
      $region9: #{tpu_custom_call.1} parent=5 // pred_check
        _
      $region10: #{tpu_custom_call.1} parent=5 // pred_check_branch
        %145 = sbr.rel (%p142) target = $region12
      $region11: #{tpu_custom_call.1} parent=5 // pred_region
        %s146 = ssub.s32 %s22, 1
        // Predicated region
        $region13: #{tpu_custom_call.1} parent=11 // pred_check
          %p147 = pneg %p43
        $region14: #{tpu_custom_call.1} parent=11 // pred_check_branch
          %149 = sbr.rel (%p147) target = $region16
        $region15: #{tpu_custom_call.1} parent=11 // pred_region
          _
        $region16: #{tpu_custom_call.1} parent=11 // pred_fallthru
          _
        // Predicated region
        $region17: #{tpu_custom_call.1} parent=11 // pred_check
          %p150 = pneg %p64
        $region18: #{tpu_custom_call.1} parent=11 // pred_check_branch
          %152 = sbr.rel (%p150) target = $region20
        $region19: #{tpu_custom_call.1} parent=11 // pred_region
          _
        $region20: #{tpu_custom_call.1} parent=11 // pred_fallthru
          _
        // Predicated region
        $region21: #{tpu_custom_call.1} parent=11 // pred_check
          %p153 = pneg %p85
        $region22: #{tpu_custom_call.1} parent=11 // pred_check_branch
          %155 = sbr.rel (%p153) target = $region24
        $region23: #{tpu_custom_call.1} parent=11 // pred_region
          _
        $region24: #{tpu_custom_call.1} parent=11 // pred_fallthru
          _
        // Predicated region
        $region25: #{tpu_custom_call.1} parent=11 // pred_check
          %p156 = pneg %p106
        $region26: #{tpu_custom_call.1} parent=11 // pred_check_branch
          %158 = sbr.rel (%p156) target = $region28
        $region27: #{tpu_custom_call.1} parent=11 // pred_region
          _
        $region28: #{tpu_custom_call.1} parent=11 // pred_fallthru
          _
      $region12: #{tpu_custom_call.1} parent=5 // pred_fallthru
        _
      %p159 = scmp.lt.s32.totalorder %s22, 3
      // Predicated region
      $region29: #{tpu_custom_call.1} parent=5 // pred_check
        %p160 = pneg %p159
      $region30: #{tpu_custom_call.1} parent=5 // pred_check_branch
        %162 = sbr.rel (%p160) target = $region32
      $region31: #{tpu_custom_call.1} parent=5 // pred_region
        _
      $region32: #{tpu_custom_call.1} parent=5 // pred_fallthru
        _
      %p163 = scmp.le.s32.totalorder 1, %s22
      %p164 = scmp.lt.s32.totalorder %s22, 4
      %p165 = pnand %p163, %p164
      %p166 = pneg %p165
      // Predicated region
      $region33: #{tpu_custom_call.1} parent=5 // pred_check
        _
      $region34: #{tpu_custom_call.1} parent=5 // pred_check_branch
        %168 = sbr.rel (%p165) target = $region36
      $region35: #{tpu_custom_call.1} parent=5 // pred_region
        %s169 = ssub.s32 %s22, 1
        %p170 = pneg %p43
        %p171 = pneg %p40
        %p172 = pneg %p64
        %p173 = pneg %p61
        %p174 = pneg %p85
        %p175 = pneg %p82
        %p176 = pneg %p106
        %p177 = pneg %p103
        %p178 = pneg %p132
        %p179 = pneg %p129
        %s180 = sand.u32 %s119, 1
        %s181 = scalar_lea.sflag [#allocation6], %s180
        %s182 = sand.u32 %s119, 1
        %s183 = smul.addr %s182, 16
        %s184 = scalar_lea.vmem [#allocation5], %s183
        %s185 = smul.u32 2, %s27
        %s187 = smul.u32 %s27, 16
        %s188 = sld [smem:[#allocation4 + %s187]]
        %s189 = scalar_lea.vmem %s1, %s188
        %v190 = vld [vmem:[%s189] sm:$0x1]
        %vm191 = vcmask 57344
        %192 = vst.msk [vmem:[#allocation2] sm:$0x1] %vm191, %v190
        %s193 = sadd.s32 %s187, 1
        %s194 = sld [smem:[#allocation4 + %s193]]
        %s195 = scalar_lea.vmem %s1, %s194
        %v196 = vld [vmem:[%s195] sm:$0x1]
        %197 = vst.msk [vmem:[#allocation2 + $0x1] sm:$0x1] %vm191, %v196
        %s198 = sadd.s32 %s187, 2
        %s199 = sld [smem:[#allocation4 + %s198]]
        %s200 = scalar_lea.vmem %s1, %s199
        %v201 = vld [vmem:[%s200] sm:$0x1]
        %202 = vst.msk [vmem:[#allocation2 + $0x2] sm:$0x1] %vm191, %v201
        %s203 = sadd.s32 %s187, 3
        %s204 = sld [smem:[#allocation4 + %s203]]
        %s205 = scalar_lea.vmem %s1, %s204
        %v206 = vld [vmem:[%s205] sm:$0x1]
        %207 = vst.msk [vmem:[#allocation2 + $0x3] sm:$0x1] %vm191, %v206
        %s208 = sadd.s32 %s187, 4
        %s209 = sld [smem:[#allocation4 + %s208]]
        %s210 = scalar_lea.vmem %s1, %s209
        %v211 = vld [vmem:[%s210] sm:$0x1]
        %212 = vst.msk [vmem:[#allocation2 + $0x4] sm:$0x1] %vm191, %v211
        %s213 = sadd.s32 %s187, 5
        %s214 = sld [smem:[#allocation4 + %s213]]
        %s215 = scalar_lea.vmem %s1, %s214
        %v216 = vld [vmem:[%s215] sm:$0x1]
        %217 = vst.msk [vmem:[#allocation2 + $0x5] sm:$0x1] %vm191, %v216
        %s218 = sadd.s32 %s187, 6
        %s219 = sld [smem:[#allocation4 + %s218]]
        %s220 = scalar_lea.vmem %s1, %s219
        %v221 = vld [vmem:[%s220] sm:$0x1]
        %222 = vst.msk [vmem:[#allocation2 + $0x6] sm:$0x1] %vm191, %v221
        %s223 = sadd.s32 %s187, 7
        %s224 = sld [smem:[#allocation4 + %s223]]
        %s225 = scalar_lea.vmem %s1, %s224
        %v226 = vld [vmem:[%s225] sm:$0x1]
        %227 = vst.msk [vmem:[#allocation2 + $0x7] sm:$0x1] %vm191, %v226
        %s228 = sadd.s32 %s187, 8
        %s229 = sld [smem:[#allocation4 + %s228]]
        %s230 = scalar_lea.vmem %s1, %s229
        %v231 = vld [vmem:[%s230] sm:$0x1]
        %232 = vst.msk [vmem:[#allocation2 + $0x8] sm:$0x1] %vm191, %v231
        %s233 = sadd.s32 %s187, 9
        %s234 = sld [smem:[#allocation4 + %s233]]
        %s235 = scalar_lea.vmem %s1, %s234
        %v236 = vld [vmem:[%s235] sm:$0x1]
        %237 = vst.msk [vmem:[#allocation2 + $0x9] sm:$0x1] %vm191, %v236
        %s238 = sadd.s32 %s187, 10
        %s239 = sld [smem:[#allocation4 + %s238]]
        %s240 = scalar_lea.vmem %s1, %s239
        %v241 = vld [vmem:[%s240] sm:$0x1]
        %242 = vst.msk [vmem:[#allocation2 + $0xa] sm:$0x1] %vm191, %v241
        %s243 = sadd.s32 %s187, 11
        %s244 = sld [smem:[#allocation4 + %s243]]
        %s245 = scalar_lea.vmem %s1, %s244
        %v246 = vld [vmem:[%s245] sm:$0x1]
        %247 = vst.msk [vmem:[#allocation2 + $0xb] sm:$0x1] %vm191, %v246
        %s248 = sadd.s32 %s187, 12
        %s249 = sld [smem:[#allocation4 + %s248]]
        %s250 = scalar_lea.vmem %s1, %s249
        %v251 = vld [vmem:[%s250] sm:$0x1]
        %252 = vst.msk [vmem:[#allocation2 + $0xc] sm:$0x1] %vm191, %v251
        %s253 = sadd.s32 %s187, 13
        %s254 = sld [smem:[#allocation4 + %s253]]
        %s255 = scalar_lea.vmem %s1, %s254
        %v256 = vld [vmem:[%s255] sm:$0x1]
        %257 = vst.msk [vmem:[#allocation2 + $0xd] sm:$0x1] %vm191, %v256
        %s258 = sadd.s32 %s187, 14
        %s259 = sld [smem:[#allocation4 + %s258]]
        %s260 = scalar_lea.vmem %s1, %s259
        %v261 = vld [vmem:[%s260] sm:$0x1]
        %262 = vst.msk [vmem:[#allocation2 + $0xe] sm:$0x1] %vm191, %v261
        %s263 = sadd.s32 %s187, 15
        %s264 = sld [smem:[#allocation4 + %s263]]
        %s265 = scalar_lea.vmem %s1, %s264
        %v266 = vld [vmem:[%s265] sm:$0x1]
        %267 = vst.msk [vmem:[#allocation2 + $0xf] sm:$0x1] %vm191, %v266
        %v268 = vld [vmem:[#allocation2] sm:$0xff]
        %v269 = vld [vmem:[#allocation2 + $0x8] sm:$0xff]
        %v270 = vld [vmem:[%s2] sm:$0xf]
        %v271 = vld [vmem:[%s3] sm:$0xf]
        %v272 = vld [vmem:[%s4] sm:$0xf]
        %v273 = vld [vmem:[%s4 + $0x4] sm:$0xf]
        %v274 = vld [vmem:[%s4 + $0x8] sm:$0xf]
        %v275 = vld [vmem:[%s4 + $0xc] sm:$0xf]
        %v276 = vshll.u32 %v268, 16
        %v277 = vshll.u32 %v269, 16
        %v280 = vshrl.u32 %v268, 16
        %v281 = vshrl.u32 %v269, 16
        %v282 = vshll.u32 %v280, 16
        %v283 = vshll.u32 %v281, 16
        %v286 = vpack.c.bf16 %v277, %v276
        %v287 = vpack.c.bf16 %v283, %v282
        %vm288 = vcmask 64512
        %v290 = vsel %vm288, %v287, 0
        %vm292 = vcmask 1043456
        %v294 = vsel %vm292, %v271, 0
        %296 = vmatpush.bf16.msra.mxu0 0
        %297 = vmatpush.bf16.msra.mxu0 0
        %298 = vmatpush.bf16.msra.mxu0 0
        %299 = vmatpush.bf16.msra.mxu0 0
        %300 = vmatpush.bf16.msra.mxu0 0
        %301 = vmatpush.bf16.msra.mxu0 0
        %302 = vmatpush.bf16.msra.mxu0 0
        %303 = vmatpush.bf16.msra.mxu0 %v294
        %304 = vmatmul.bf16.gmra.mxu0 %v290
        %v305 = vpop.f32.mrf.mxu0
        %v306 = vadd.f32 0.0, %v305
        %v307 = vpop.f32.mrf.mxu0
        %v308 = vadd.f32 0.0, %v307
        %309 = vdwg.mxu0
        %v311 = vsel %vm288, %v286, 0
        %v314 = vsel %vm292, %v270, 0
        %316 = vmatpush.bf16.msra.mxu0 0
        %317 = vmatpush.bf16.msra.mxu0 0
        %318 = vmatpush.bf16.msra.mxu0 0
        %319 = vmatpush.bf16.msra.mxu0 0
        %320 = vmatpush.bf16.msra.mxu0 0
        %321 = vmatpush.bf16.msra.mxu0 0
        %322 = vmatpush.bf16.msra.mxu0 0
        %323 = vmatpush.bf16.msra.mxu0 %v314
        %324 = vmatmul.bf16.gmra.mxu0 %v311
        %v325 = vpop.f32.mrf.mxu0
        %v326 = vadd.f32 %v306, %v325
        %v327 = vpop.f32.mrf.mxu0
        %v328 = vadd.f32 %v308, %v327
        %329 = vdwg.mxu0
        %v330 = vmax.f32 %v326, 0.0
        %v331 = vmax.f32 %v328, 0.0
        %v332 = vpack.c.bf16 %v331, %v330
        %v337 = vunpack.c.l.b16 %v272
        %v338 = vunpack.c.l.b16 %v273
        %v339 = vunpack.c.l.b16 %v274
        %v340 = vunpack.c.l.b16 %v275
        %v341 = vpack.c.b16 %v338, %v337
        %v342 = vpack.c.b16 %v340, %v339
        %vm345 = vcmask 261120
        %v347 = vsel %vm345, %v332, 0
        %349 = vmatpush.bf16.msra.mxu0 0
        %350 = vmatpush.bf16.msra.mxu0 0
        %351 = vmatpush.bf16.msra.mxu0 0
        %352 = vmatpush.bf16.msra.mxu0 0
        %353 = vmatpush.bf16.msra.mxu0 0
        %354 = vmatpush.bf16.msra.mxu0 0
        %355 = vmatpush.bf16.msra.mxu0 %v342
        %356 = vmatpush.bf16.msra.mxu0 %v341
        %357 = vmatmul.bf16.gmra.mxu0 %v347
        %v358 = vpop.f32.mrf.mxu0
        %v359 = vadd.f32 0.0, %v358
        %v360 = vpop.f32.mrf.mxu0
        %v361 = vadd.f32 0.0, %v360
        %362 = vdwg.mxu0
        %363 = vst [vmem:[%s184] sm:$0xff] %v359
        %364 = vst [vmem:[%s184 + $0x8] sm:$0xff] %v361
        %s365 = sand.u32 %s119, 1
        %s366 = scalar_lea.sflag [#allocation6], %s365
        %s367 = sand.u32 %s119, 1
        %s368 = smul.addr %s367, 16
        %s369 = scalar_lea.vmem [#allocation5], %s368
        // Predicated region
        $region37: #{tpu_custom_call.1} parent=35 // pred_check
          %p370 = pneg %p129
        $region38: #{tpu_custom_call.1} parent=35 // pred_check_branch
          %372 = sbr.rel (%p370) target = $region40
        $region39: #{tpu_custom_call.1} parent=35 // pred_region
          %s373 = smul.u32 2, %s27
          %375 = vsyncadd %s366, 0
          %s376 = smul.addr %s373, 8
          %s377 = scalar_lea.hbm %s5, %s376
          %s378 = sshll.u32 %s369, 4
          %s379 = int_to_ptr.vmem [resolvable:$true] %s378
          %s380 = sshll.u32 %s377, 4
          %s381 = int_to_ptr.hbm [resolvable:$true] %s380
          %386 = dma.vmem_to_hbm [thread:$0]  %s379, 256, %s381, %s366, 128, 128, 8
        $region40: #{tpu_custom_call.1} parent=35 // pred_fallthru
          _
      $region36: #{tpu_custom_call.1} parent=5 // pred_fallthru
        _
      %p387 = scmp.le.s32.totalorder 2, %s22
      // Predicated region
      $region41: #{tpu_custom_call.1} parent=5 // pred_check
        %p388 = pneg %p387
      $region42: #{tpu_custom_call.1} parent=5 // pred_check_branch
        %390 = sbr.rel (%p388) target = $region44
      $region43: #{tpu_custom_call.1} parent=5 // pred_region
        %s391 = ssub.s32 %s22, 2
        // Predicated region
        $region45: #{tpu_custom_call.1} parent=43 // pred_check
          %p392 = pneg %p135
        $region46: #{tpu_custom_call.1} parent=43 // pred_check_branch
          %394 = sbr.rel (%p392) target = $region48
        $region47: #{tpu_custom_call.1} parent=43 // pred_region
          %s395 = sand.u32 %s120, 1
          %s396 = scalar_lea.sflag [#allocation6], %s395
          %s397 = sand.u32 %s120, 1
          %s398 = smul.addr %s397, 16
          %s399 = scalar_lea.vmem [#allocation5], %s398
          %401 = dma.done %s396, 256
        $region48: #{tpu_custom_call.1} parent=43 // pred_fallthru
          _
      $region44: #{tpu_custom_call.1} parent=5 // pred_fallthru
        _
    $region6: #{tpu_custom_call.1} parent=1 // loop_footer
      %s26 = sadd.s32 1, %s22
    $region7: #{tpu_custom_call.1} parent=1 // loop_footer_branch
      %21 = sbr.rel target = $region3
    $region8: #{tpu_custom_call.1} parent=1 // loop_exit
      _
    %402 = vsyncpa [#allocation6], 1
    %s403 = scalar_lea.sflag [#allocation6], 1
    %404 = vsyncpa %s403, 1

</llo_original>
